<compile_context>
chip_gen: v7x
topology: tpu7x:2x2x1
jax: 0.10.0
libtpu: 0.0.40
codegen_flags: <defaults>
</compile_context>

<pallas_src>
import functools

import jax
import jax.numpy as jnp
from jax.experimental import pallas as pl
from jax.experimental.pallas import tpu as pltpu

EPS = 1e-6
_SQRT_2_OVER_PI = 0.7978845608028654  # sqrt(2/pi), for tanh-approx GELU


def _round_up(x, m):
    return (x + m - 1) // m * m


# -----------------------------------------------------------------------------
# Kernels
# -----------------------------------------------------------------------------
def _t5_ff_kernel_resident(x_ref, w0_ref, w1_ref, wo_ref, o_ref, *, d_actual):
    """Grid = (token_tiles,).  All weight slabs are VMEM-resident."""
    x = x_ref[...].astype(jnp.float32)
    # RMS norm (no mean subtraction); divide by the *unpadded* model dim
    # (padded D columns are zero, so they don't pollute the sum).
    var = jnp.sum(x * x, axis=-1, keepdims=True) * (1.0 / d_actual)
    xn = (x * jax.lax.rsqrt(var + EPS)).astype(w0_ref.dtype)  # ln_weight folded into wi_*
    h0 = jnp.dot(xn, w0_ref[...], preferred_element_type=jnp.float32)
    h1 = jnp.dot(xn, w1_ref[...], preferred_element_type=jnp.float32)
    gelu = 0.5 * h0 * (1.0 + jnp.tanh(_SQRT_2_OVER_PI * (h0 + 0.044715 * h0 * h0 * h0)))
    h = (gelu * h1).astype(wo_ref.dtype)
    out = x + jnp.dot(h, wo_ref[...], preferred_element_type=jnp.float32)
    o_ref[...] = out.astype(o_ref.dtype)


def _t5_ff_kernel_ftiled(x_ref, w0_ref, w1_ref, wo_ref, o_ref, xn_ref, acc_ref,
                         *, d_actual):
    """Grid = (token_tiles, F_tiles).  F axis is a reduction ("arbitrary")."""
    f = pl.program_id(1)

    # --- once per token tile: RMS norm + accumulator init ---
    @pl.when(f == 0)
    def _():
        x = x_ref[...].astype(jnp.float32)
        var = jnp.sum(x * x, axis=-1, keepdims=True) * (1.0 / d_actual)
        xn = x * jax.lax.rsqrt(var + EPS)
        xn_ref[...] = xn.astype(xn_ref.dtype)   # ln_weight already folded into wi_*
        acc_ref[...] = jnp.zeros_like(acc_ref)

    xn = xn_ref[...]                                                    # (tm, D_pad)
    h0 = jnp.dot(xn, w0_ref[...], preferred_element_type=jnp.float32)   # (tm, tf)
    h1 = jnp.dot(xn, w1_ref[...], preferred_element_type=jnp.float32)   # (tm, tf)
    gelu = 0.5 * h0 * (1.0 + jnp.tanh(_SQRT_2_OVER_PI * (h0 + 0.044715 * h0 * h0 * h0)))
    h = (gelu * h1).astype(wo_ref.dtype)
    acc_ref[...] += jnp.dot(h, wo_ref[...], preferred_element_type=jnp.float32)

    # --- on the last F step: residual add + store ---
    @pl.when(f == pl.num_programs(1) - 1)
    def _():
        o_ref[...] = (x_ref[...].astype(jnp.float32) + acc_ref[...]).astype(o_ref.dtype)


# -----------------------------------------------------------------------------
# One-time weight preparation (hoisted out of the per-call hot path).
# -----------------------------------------------------------------------------
def prepare_t5_ff_weights(ln_weight, wi0, wi1, wo, compute_dtype=jnp.bfloat16):
    """wi0/wi1: (D, F) pre-transposed (= torch weight.T); wo: (F, D); ln_weight: (D,).

    Folds the RMS-norm scale into wi_0 / wi_1, casts to the MXU compute dtype
    (default bf16 -- f32 accumulation is kept in the kernels) and zero-pads the
    lane dims to 128-multiples.  Call once at model load.
    """
    D, F = wi0.shape
    assert wi1.shape == (D, F) and wo.shape == (F, D) and ln_weight.shape == (D,)
    cdtype = jnp.dtype(compute_dtype)
    D_pad = _round_up(D, 128)
    F_pad = _round_up(F, 128)

    lnw = ln_weight.astype(jnp.float32)
    # (lnw * xn) @ W == xn @ (lnw[:, None] * W)   -- quantized after folding.
    w0f = (lnw[:, None] * wi0.astype(jnp.float32)).astype(cdtype)
    w1f = (lnw[:, None] * wi1.astype(jnp.float32)).astype(cdtype)
    wof = wo.astype(cdtype)

    w0p = jnp.pad(w0f, ((0, D_pad - D), (0, F_pad - F)))
    w1p = jnp.pad(w1f, ((0, D_pad - D), (0, F_pad - F)))
    wop = jnp.pad(wof, ((0, F_pad - F), (0, D_pad - D)))

    return {"w0": w0p, "w1": w1p, "wo": wop,
            "D": D, "F": F, "D_pad": D_pad, "F_pad": F_pad, "cdtype": cdtype}


def _vmem_caps():
    """Generation-aware (budget, compiler_limit) in bytes."""
    try:
        cap = int(pltpu.get_tpu_info().vmem_capacity_bytes)
    except Exception:
        cap = 128 * (1 << 20)
    if cap <= 64 * (1 << 20):
        # v7x-class: 64 MiB physical per core. Never hand the full 64 MiB to the
        # kernel -- leave headroom for Mosaic internal scratch / semaphores.
        limit = min(cap, 52 * (1 << 20))
        budget = 44 * (1 << 20)
    else:
        # v5e / v6e: 128 MiB physical. Use most of it.
        limit = min(cap, 100 * (1 << 20))
        budget = 88 * (1 << 20)
    return budget, limit


# -----------------------------------------------------------------------------
# Per-call wrapper
# -----------------------------------------------------------------------------
def t5_layer_ff(x, prep, *, token_tile=512, f_tile=1024, weight_resident=None):
    """x: (B, S, D). prep: output of prepare_t5_ff_weights. Returns x + FFN(RMSNorm(x))."""
    B, S, D = x.shape
    assert D == prep["D"], "model_dim mismatch with prepared weights"
    F, D_pad, F_pad = prep["F"], prep["D_pad"], prep["F_pad"]
    cdtype = prep["cdtype"]
    T = B * S

    x_b = jnp.dtype(x.dtype).itemsize
    o_b = x_b
    w_b = cdtype.itemsize

    budget, vmem_limit = _vmem_caps()

    # --- token tile: multiple of 256 when large (MXU rows / dense stores), 8 otherwise ---
    tm = min(token_tile, _round_up(T, 8))
    align = 256 if tm >= 256 else 8
    tm = _round_up(tm, align)
    # Keep >=2 token blocks when T allows it so the "parallel" axis can feed both
    # v7x TensorCores instead of leaving one idle.
    while T > 512 and pl.cdiv(T, tm) < 2 and tm > 256:
        tm = _round_up(tm // 2, 256)

    # --- F tile: largest multiple of 128 that divides F_pad and is <= cap ---
    def _pick_tf(cap):
        nf = F_pad // 128
        best = 1
        for d in range(1, nf + 1):
            if nf % d == 0 and d * 128 <= cap:
                best = d
        return best * 128

    def _vmem_resident(tm_):
        w_buf = 2 * 3 * D_pad * F_pad * w_b            # (possibly double-buffered) resident weights
        act = 2 * tm_ * D_pad * (x_b + o_b)            # x tile + out tile
        inter = (3 * 4 + w_b) * tm_ * F_pad            # h0/h1/gelu (f32) + h (cdtype)
        return w_buf + act + inter

    def _vmem_ftiled(tm_, tf_):
        x_buf = 2 * tm_ * D_pad * x_b
        w_buf = 2 * 3 * D_pad * tf_ * w_b              # double-buffered wi0/wi1/wo slabs
        o_buf = 2 * tm_ * D_pad * o_b
        scratch = tm_ * D_pad * (4 + w_b)              # f32 acc + xn scratch
        inter = (3 * 4 + w_b) * tm_ * tf_
        return x_buf + w_buf + o_buf + scratch + inter

    # --- pick execution path (weight-resident vs F-tiled reduction) ---
    if weight_resident is None:
        weight_resident = _vmem_resident(tm) <= budget

    kernel_common = dict(d_actual=float(D))

    # x only needs padding in the model dim (never for real T5 shapes); the ragged
    # last token tile is handled by the grid (OOB rows are independent and their
    # writes are dropped).
    x2d = x.reshape(T, D)
    if D_pad != D:
        x2d = jnp.pad(x2d, ((0, 0), (0, D_pad - D)))

    if weight_resident:
        grid = (pl.cdiv(T, tm),)
        cost = pl.CostEstimate(
            flops=6 * T * D * F,
            transcendentals=T * F,
            bytes_accessed=int(T * D_pad * (x_b + o_b) + 3 * D_pad * F_pad * w_b),
        )
        out2d = pl.pallas_call(
            functools.partial(_t5_ff_kernel_resident, **kernel_common),
            out_shape=jax.ShapeDtypeStruct((T, D_pad), x.dtype),
            grid_spec=pltpu.PrefetchScalarGridSpec(
                num_scalar_prefetch=0,
                grid=grid,
                in_specs=[
                    pl.BlockSpec((tm, D_pad), lambda i: (i, 0)),        # x token tile
                    pl.BlockSpec((D_pad, F_pad), lambda i: (0, 0)),     # wi_0 (resident)
                    pl.BlockSpec((D_pad, F_pad), lambda i: (0, 0)),     # wi_1 (resident)
                    pl.BlockSpec((F_pad, D_pad), lambda i: (0, 0)),     # wo   (resident)
                ],
                out_specs=pl.BlockSpec((tm, D_pad), lambda i: (i, 0)),
            ),
            compiler_params=pltpu.CompilerParams(
                dimension_semantics=("parallel",),
                vmem_limit_bytes=int(vmem_limit),
            ),
            cost_estimate=cost,
        )(x2d, prep["w0"], prep["w1"], prep["wo"])
    else:
        tf = _pick_tf(min(f_tile, F_pad))
        while _vmem_ftiled(tm, tf) > budget and tf > 128:
            tf = _pick_tf(tf - 128)
        tm_min = 8
        while _vmem_ftiled(tm, tf) > budget and tm > tm_min:
            tm = max(tm_min, _round_up(tm // 2, 256 if tm // 2 >= 256 else 8))

        grid = (pl.cdiv(T, tm), F_pad // tf)
        n_token_tiles = grid[0]
        cost = pl.CostEstimate(
            flops=6 * T * D * F,
            transcendentals=T * F,
            bytes_accessed=int(T * D_pad * (x_b + o_b)
                               + n_token_tiles * 3 * D_pad * F_pad * w_b),
        )
        # TODO(synk): if profiling shows exposed DMA latency (latency-bound, not
        # BW-bound), add pipeline_mode=pl.Buffered(3) to the three weight specs.
        out2d = pl.pallas_call(
            functools.partial(_t5_ff_kernel_ftiled, **kernel_common),
            out_shape=jax.ShapeDtypeStruct((T, D_pad), x.dtype),
            grid_spec=pltpu.PrefetchScalarGridSpec(
                num_scalar_prefetch=0,
                grid=grid,
                in_specs=[
                    pl.BlockSpec((tm, D_pad), lambda i, f: (i, 0)),   # x tile (revisited over f)
                    pl.BlockSpec((D_pad, tf), lambda i, f: (0, f)),   # wi_0 slab
                    pl.BlockSpec((D_pad, tf), lambda i, f: (0, f)),   # wi_1 slab
                    pl.BlockSpec((tf, D_pad), lambda i, f: (f, 0)),   # wo slab
                ],
                out_specs=pl.BlockSpec((tm, D_pad), lambda i, f: (i, 0)),
                scratch_shapes=[
                    pltpu.VMEM((tm, D_pad), cdtype),        # normalized activations
                    pltpu.VMEM((tm, D_pad), jnp.float32),   # wo accumulator
                ],
            ),
            compiler_params=pltpu.CompilerParams(
                dimension_semantics=("parallel", "arbitrary"),
                vmem_limit_bytes=int(vmem_limit),
            ),
            cost_estimate=cost,
        )(x2d, prep["w0"], prep["w1"], prep["wo"])

    if D_pad != D:
        out2d = out2d[:, :D]
    return out2d.reshape(B, S, D)


# -----------------------------------------------------------------------------
# Pure-JAX reference (matches the PyTorch T5LayerFF semantics)
# -----------------------------------------------------------------------------
def _reference(x, ln_weight, wi0, wi1, wo):
    xf = x.astype(jnp.float32)
    var = jnp.mean(xf * xf, axis=-1, keepdims=True)
    xn = ln_weight * (xf * jax.lax.rsqrt(var + EPS))
    h0 = xn @ wi0
    gelu = 0.5 * h0 * (1.0 + jnp.tanh(_SQRT_2_OVER_PI * (h0 + 0.044715 * h0 ** 3)))
    h = gelu * (xn @ wi1)
    return x + h @ wo


if __name__ == "__main__":
    # Small shapes, deliberately not 128-aligned, to exercise D padding, ragged
    # token tiles, both grid axes (F-tiled path) and the weight-resident path.
    batch, seq, model_dim, ff_dim = 2, 23, 96, 320
    key = jax.random.PRNGKey(0)
    kx, k0, k1, k2, kl = jax.random.split(key, 5)

    x = jax.random.normal(kx, (batch, seq, model_dim), dtype=jnp.float32)
    # PyTorch Linear weights are (out, in); build (in, out) directly (= W.T).
    wi0 = jax.random.normal(k0, (model_dim, ff_dim), dtype=jnp.float32) * 0.05
    wi1 = jax.random.normal(k1, (model_dim, ff_dim), dtype=jnp.float32) * 0.05
    wo = jax.random.normal(k2, (ff_dim, model_dim), dtype=jnp.float32) * 0.05
    # T5LayerNorm initializes weight to ones; perturb deterministically to exercise it.
    ln_w = jnp.ones((model_dim,), dtype=jnp.float32) + 0.01 * jax.random.normal(
        kl, (model_dim,), dtype=jnp.float32)

    ref = _reference(x, ln_w, wi0, wi1, wo)

    # Path 1: F-tiled reduction path with f32 MXU compute -> exact-semantics check.
    prep_f32 = prepare_t5_ff_weights(ln_w, wi0, wi1, wo, compute_dtype=jnp.float32)
    out1 = t5_layer_ff(x, prep_f32, token_tile=16, f_tile=128, weight_resident=False)
    out1 = jax.block_until_ready(out1)
    assert out1.shape == x.shape
    assert jnp.allclose(out1, ref, atol=1e-3, rtol=1e-3), "f-tiled path mismatch vs reference"

    # Path 2: weight-resident path with default bf16 MXU compute (production config).
    prep_bf16 = prepare_t5_ff_weights(ln_w, wi0, wi1, wo)
    out2 = t5_layer_ff(x, prep_bf16)
    out2 = jax.block_until_ready(out2)
    assert out2.shape == x.shape
    assert jnp.allclose(out2, ref, atol=3e-2, rtol=3e-2), "resident path mismatch vs reference"

    print("KERNEL_OK")
</pallas_src>

<mosaic_0001>
module attributes {stable_mosaic.version = 11 : i64} {
  func.func @_t5_ff_kernel_ftiled(%arg0: i32, %arg1: i32, %arg2: memref<16x128xf32, #tpu.memory_space<vmem>>, %arg3: memref<128x128xf32, #tpu.memory_space<vmem>>, %arg4: memref<128x128xf32, #tpu.memory_space<vmem>>, %arg5: memref<128x128xf32, #tpu.memory_space<vmem>>, %arg6: memref<16x128xf32, #tpu.memory_space<vmem>>, %arg7: memref<16x128xf32, #tpu.memory_space<vmem>>, %arg8: memref<16x128xf32, #tpu.memory_space<vmem>>) attributes {dimension_semantics = [#tpu.dimension_semantics<parallel>, #tpu.dimension_semantics<arbitrary>], iteration_bounds = array<i64: 3, 3>, scalar_prefetch = 0 : i64, scratch_operands = 2 : i64, tpu.core_type = #tpu.core_type<tc>, window_params = [{transform_indices = @transform_0, window_bounds = array<i64: 16, 128>}, {transform_indices = @transform_1, window_bounds = array<i64: 128, 128>}, {transform_indices = @transform_2, window_bounds = array<i64: 128, 128>}, {transform_indices = @transform_3, window_bounds = array<i64: 128, 128>}, {transform_indices = @transform_4, window_bounds = array<i64: 16, 128>}]} {
    %c0_i32 = arith.constant 0 : i32
    %0 = arith.cmpi eq, %arg1, %c0_i32 : i32
    %1 = arith.extui %0 : i1 to i32
    %c0_i32_0 = arith.constant 0 : i32
    %2 = arith.cmpi ne, %1, %c0_i32_0 : i32
    scf.if %2 {
      %c0_19 = arith.constant 0 : index
      %c0_20 = arith.constant 0 : index
      %30 = vector.load %arg2[%c0_19, %c0_20] : memref<16x128xf32, #tpu.memory_space<vmem>>, vector<16x128xf32>
      %31 = arith.mulf %30, %30 : vector<16x128xf32>
      %cst_21 = arith.constant dense<0.000000e+00> : vector<16xf32>
      %32 = vector.multi_reduction <add>, %31, %cst_21 [1] : vector<16x128xf32> to vector<16xf32>
      %33 = vector.shape_cast %32 : vector<16xf32> to vector<16x1xf32>
      %cst_22 = arith.constant 0.010416667 : f32
      %34 = vector.broadcast %cst_22 : f32 to vector<16x1xf32>
      %35 = arith.mulf %33, %34 : vector<16x1xf32>
      %cst_23 = arith.constant 9.99999997E-7 : f32
      %36 = vector.broadcast %cst_23 : f32 to vector<16x1xf32>
      %37 = arith.addf %35, %36 : vector<16x1xf32>
      %38 = math.rsqrt %37 : vector<16x1xf32>
      %39 = vector.broadcast %38 : vector<16x1xf32> to vector<16x128xf32>
      %40 = arith.mulf %30, %39 : vector<16x128xf32>
      %c0_24 = arith.constant 0 : index
      %c0_25 = arith.constant 0 : index
      %41 = vector.load %arg7[%c0_24, %c0_25] : memref<16x128xf32, #tpu.memory_space<vmem>>, vector<16x128xf32>
      tpu.vector_store %arg7[%c0_24, %c0_25], %40 {strides = array<i32>} : memref<16x128xf32, #tpu.memory_space<vmem>>, vector<16x128xf32>,
      %cst_26 = arith.constant 0.000000e+00 : f32
      %42 = vector.broadcast %cst_26 : f32 to vector<16x128xf32>
      %c0_27 = arith.constant 0 : index
      %c0_28 = arith.constant 0 : index
      %43 = vector.load %arg8[%c0_27, %c0_28] : memref<16x128xf32, #tpu.memory_space<vmem>>, vector<16x128xf32>
      tpu.vector_store %arg8[%c0_27, %c0_28], %42 {strides = array<i32>} : memref<16x128xf32, #tpu.memory_space<vmem>>, vector<16x128xf32>,
    } else {
    }
    %c0 = arith.constant 0 : index
    %c0_1 = arith.constant 0 : index
    %3 = vector.load %arg7[%c0, %c0_1] : memref<16x128xf32, #tpu.memory_space<vmem>>, vector<16x128xf32>
    %c0_2 = arith.constant 0 : index
    %c0_3 = arith.constant 0 : index
    %4 = vector.load %arg3[%c0_2, %c0_3] : memref<128x128xf32, #tpu.memory_space<vmem>>, vector<128x128xf32>
    %cst = arith.constant dense<0.000000e+00> : vector<16x128xf32>
    %5 = tpu.matmul %3, %4, %cst {dimension_numbers = #tpu.dot_dimension_numbers<[1], [0], [0], [1], [0, 0, 1, 1], [], []>} : vector<16x128xf32>, vector<128x128xf32>, vector<16x128xf32> -> vector<16x128xf32>
    %c0_4 = arith.constant 0 : index
    %c0_5 = arith.constant 0 : index
    %6 = vector.load %arg4[%c0_4, %c0_5] : memref<128x128xf32, #tpu.memory_space<vmem>>, vector<128x128xf32>
    %cst_6 = arith.constant dense<0.000000e+00> : vector<16x128xf32>
    %7 = tpu.matmul %3, %6, %cst_6 {dimension_numbers = #tpu.dot_dimension_numbers<[1], [0], [0], [1], [0, 0, 1, 1], [], []>} : vector<16x128xf32>, vector<128x128xf32>, vector<16x128xf32> -> vector<16x128xf32>
    %cst_7 = arith.constant 5.000000e-01 : f32
    %8 = vector.broadcast %cst_7 : f32 to vector<16x128xf32>
    %9 = arith.mulf %8, %5 : vector<16x128xf32>
    %cst_8 = arith.constant 4.471500e-02 : f32
    %10 = vector.broadcast %cst_8 : f32 to vector<16x128xf32>
    %11 = arith.mulf %10, %5 : vector<16x128xf32>
    %12 = arith.mulf %11, %5 : vector<16x128xf32>
    %13 = arith.mulf %12, %5 : vector<16x128xf32>
    %14 = arith.addf %5, %13 : vector<16x128xf32>
    %cst_9 = arith.constant 0.797884583 : f32
    %15 = vector.broadcast %cst_9 : f32 to vector<16x128xf32>
    %16 = arith.mulf %15, %14 : vector<16x128xf32>
    %17 = math.tanh %16 : vector<16x128xf32>
    %cst_10 = arith.constant 1.000000e+00 : f32
    %18 = vector.broadcast %cst_10 : f32 to vector<16x128xf32>
    %19 = arith.addf %18, %17 : vector<16x128xf32>
    %20 = arith.mulf %9, %19 : vector<16x128xf32>
    %21 = arith.mulf %20, %7 : vector<16x128xf32>
    %c0_11 = arith.constant 0 : index
    %c0_12 = arith.constant 0 : index
    %22 = vector.load %arg8[%c0_11, %c0_12] : memref<16x128xf32, #tpu.memory_space<vmem>>, vector<16x128xf32>
    %c0_13 = arith.constant 0 : index
    %c0_14 = arith.constant 0 : index
    %23 = vector.load %arg5[%c0_13, %c0_14] : memref<128x128xf32, #tpu.memory_space<vmem>>, vector<128x128xf32>
    %cst_15 = arith.constant dense<0.000000e+00> : vector<16x128xf32>
    %24 = tpu.matmul %21, %23, %cst_15 {dimension_numbers = #tpu.dot_dimension_numbers<[1], [0], [0], [1], [0, 0, 1, 1], [], []>} : vector<16x128xf32>, vector<128x128xf32>, vector<16x128xf32> -> vector<16x128xf32>
    %25 = arith.addf %22, %24 : vector<16x128xf32>
    %c0_16 = arith.constant 0 : index
    %c0_17 = arith.constant 0 : index
    %26 = vector.load %arg8[%c0_16, %c0_17] : memref<16x128xf32, #tpu.memory_space<vmem>>, vector<16x128xf32>
    tpu.vector_store %arg8[%c0_16, %c0_17], %25 {strides = array<i32>} : memref<16x128xf32, #tpu.memory_space<vmem>>, vector<16x128xf32>,
    %c2_i32 = arith.constant 2 : i32
    %27 = arith.cmpi eq, %arg1, %c2_i32 : i32
    %28 = arith.extui %27 : i1 to i32
    %c0_i32_18 = arith.constant 0 : i32
    %29 = arith.cmpi ne, %28, %c0_i32_18 : i32
    scf.if %29 {
      %c0_19 = arith.constant 0 : index
      %c0_20 = arith.constant 0 : index
      %30 = vector.load %arg2[%c0_19, %c0_20] : memref<16x128xf32, #tpu.memory_space<vmem>>, vector<16x128xf32>
      %c0_21 = arith.constant 0 : index
      %c0_22 = arith.constant 0 : index
      %31 = vector.load %arg8[%c0_21, %c0_22] : memref<16x128xf32, #tpu.memory_space<vmem>>, vector<16x128xf32>
      %32 = arith.addf %30, %31 : vector<16x128xf32>
      %c0_23 = arith.constant 0 : index
      %c0_24 = arith.constant 0 : index
      %33 = vector.load %arg6[%c0_23, %c0_24] : memref<16x128xf32, #tpu.memory_space<vmem>>, vector<16x128xf32>
      tpu.vector_store %arg6[%c0_23, %c0_24], %32 {strides = array<i32>} : memref<16x128xf32, #tpu.memory_space<vmem>>, vector<16x128xf32>,
    } else {
    }
    return
  }
  func.func @transform_0(%arg0: i32, %arg1: i32) -> (i32, i32) {
    %c0_i32 = arith.constant 0 : i32
    %c0_i32_0 = arith.constant 0 : i32
    return %arg0, %c0_i32 : i32, i32
  }
  func.func @transform_1(%arg0: i32, %arg1: i32) -> (i32, i32) {
    %c0_i32 = arith.constant 0 : i32
    %c0_i32_0 = arith.constant 0 : i32
    return %c0_i32, %arg1 : i32, i32
  }
  func.func @transform_2(%arg0: i32, %arg1: i32) -> (i32, i32) {
    %c0_i32 = arith.constant 0 : i32
    %c0_i32_0 = arith.constant 0 : i32
    return %c0_i32, %arg1 : i32, i32
  }
  func.func @transform_3(%arg0: i32, %arg1: i32) -> (i32, i32) {
    %c0_i32 = arith.constant 0 : i32
    %c0_i32_0 = arith.constant 0 : i32
    return %arg1, %c0_i32 : i32, i32
  }
  func.func @transform_4(%arg0: i32, %arg1: i32) -> (i32, i32) {
    %c0_i32 = arith.constant 0 : i32
    %c0_i32_0 = arith.constant 0 : i32
    return %arg0, %c0_i32 : i32, i32
  }
}

</mosaic_0001>

<llo_original>
// kernel: tpu_custom_call.1
$region0: #{tpu_custom_call.1}
  #allocation0 [shape = 'u32[]', space=smem, size = 0x4, offset = 0x4, fixed_abs, tag = 'smem constant byte address 0x4 - core index']
  #allocation1 [shape = 'u32[144,128]{1,0:T(1,128)}', space=vmem, size = 0x12000, scoped, tag = 'internal scratch']
  #allocation2 [shape = 'f32[16,128]{1,0:T(8,128)}', space=vmem, size = 0x2000, scoped, tag = 'scratch operand']
  #allocation3 [shape = 'f32[16,128]{1,0:T(8,128)}', space=vmem, size = 0x2000, scoped, tag = 'scratch operand']
  %s0 = inlined_call_operand.hbm [shape: f32[46,128], index: 0, kind: input, shape index: {}]
  %s1 = inlined_call_operand.hbm [shape: f32[128,384], index: 1, kind: input, shape index: {}]
  %s2 = inlined_call_operand.hbm [shape: f32[128,384], index: 2, kind: input, shape index: {}]
  %s3 = inlined_call_operand.hbm [shape: f32[384,128], index: 3, kind: input, shape index: {}]
  %s4 = inlined_call_operand.hbm [shape: f32[46,128], index: 4, kind: output, shape index: {}]
  %s5 = sld [smem:[#allocation0]]
  $region73: #{tpu_custom_call.1} parent=0
    _
  %s7 = ssub.s32 1, %s5
  %s8 = scalar_select 0, %s7, %s5
  $region1: #{tpu_custom_call.1} parent=0
    #allocation4 [shape = 'u8[16384]{0}', space=vmem, size = 0x4000, scoped, tag = 'input window, operand 0']
    #allocation5 [shape = 's32[2]{0}', space=sflag, size = 0x8, scoped, tag = 'scoped memory for tpu_custom_call.1']
    #allocation6 [shape = 's32[2]{0}', space=sflag, size = 0x8, scoped, tag = 'scoped memory for tpu_custom_call.1']
    #allocation7 [shape = 'u8[131072]{0}', space=vmem, size = 0x20000, scoped, tag = 'input window, operand 1']
    #allocation8 [shape = 's32[2]{0}', space=sflag, size = 0x8, scoped, tag = 'scoped memory for tpu_custom_call.1']
    #allocation9 [shape = 'u8[131072]{0}', space=vmem, size = 0x20000, scoped, tag = 'input window, operand 2']
    #allocation10 [shape = 'u8[131072]{0}', space=vmem, size = 0x20000, scoped, tag = 'input window, operand 3']
    #allocation11 [shape = 's32[2]{0}', space=sflag, size = 0x8, scoped, tag = 'scoped memory for tpu_custom_call.1']
    #allocation12 [shape = 'u8[16384]{0}', space=vmem, size = 0x4000, scoped, tag = 'output window, operand 0']
    %9 = vsyncpa [#allocation5], 0
    %s10 = scalar_lea.sflag [#allocation5], 1
    %11 = vsyncpa %s10, 0
    %12 = vsyncpa [#allocation8], 0
    %s13 = scalar_lea.sflag [#allocation8], 1
    %14 = vsyncpa %s13, 0
    %15 = vsyncpa [#allocation11], 0
    %s16 = scalar_lea.sflag [#allocation11], 1
    %17 = vsyncpa %s16, 0
    %18 = vsyncpa [#allocation6], 0
    %s19 = scalar_lea.sflag [#allocation6], 1
    %20 = vsyncpa %s19, 0
    loop: start=0, step=1, limit=11
    $region2: #{tpu_custom_call.1} parent=1 // loop_pre_header
      _
    $region3: #{tpu_custom_call.1} parent=1 // loop_header
      %s22 = sphi 0, %s26
      %p23 = scmp.ge.s32.totalorder %s22, 11
      %s29 = sphi 0, %s41
      %s30 = sphi 0, %s37
      %s31 = sphi 0, %s29
      %s32 = sphi 0, %s30
      %s33 = sphi 0, %s31
      %s34 = sphi 0, %s32
      %s44 = sphi 0, %s46
      %s47 = sphi 0, %s44
      %s48 = sphi 0, %s47
      %s64 = sphi 0, %s48
      %s70 = sphi 0, %s72
      %s73 = sphi 0, %s70
      %s74 = sphi 0, %s73
      %s90 = sphi 0, %s74
      %s96 = sphi 0, %s98
      %s99 = sphi 0, %s96
      %s100 = sphi 0, %s99
      %s116 = sphi 0, %s100
      %s122 = sphi 0, %s124
      %s125 = sphi 0, %s122
      %s126 = sphi 0, %s125
      %s142 = sphi 0, %s126
      %s148 = sphi 0, %s150
      %s151 = sphi 0, %s148
      %s152 = sphi 0, %s151
      %s168 = sphi 0, %s152
    $region4: #{tpu_custom_call.1} parent=1 // loop_header_branch
      %25 = sbr.rel (%p23) target = $region8
    $region5: #{tpu_custom_call.1} parent=1 // loop_body
      %s27 = ssub.s32 %s22, 1
      %s28 = ssub.s32 %s22, 2
      %s35 = sadd.s32 1, %s30
      %p36 = scmp.ge.s32.totalorder %s35, 3
      %s37 = scalar_select %p36, 0, %s35
      %s38 = sadd.s32 1, %s29
      %s39 = scalar_select %p36, %s38, %s29
      %p40 = scmp.ge.s32.totalorder %s39, 3
      %s41 = scalar_select %p40, 0, %s39
      %s42 = ssub.s32 %s29, %s41
      %p43 = scmp.eq.s32.totalorder %s42, 0
      %s45 = sadd.s32 %s44, 1
      %s46 = scalar_select %p43, %s44, %s45
      %p49 = pneg %p43
      %p50 = scmp.eq.s32.totalorder %s22, 8
      %p51 = por %p49, %p50
      %p52 = scmp.ne.s32.totalorder %s44, %s47
      %p53 = scmp.eq.s32.totalorder %s22, 0
      %p54 = por %p52, %p53
      %p55 = scmp.ne.s32.totalorder %s44, %s47
      %p56 = scmp.eq.s32.totalorder %s27, 8
      %p57 = por %p55, %p56
      %p58 = scmp.ne.s32.totalorder %s47, %s48
      %p59 = scmp.eq.s32.totalorder %s27, 0
      %p60 = por %p58, %p59
      %p61 = scmp.ne.s32.totalorder %s47, %s48
      %p62 = scmp.eq.s32.totalorder %s28, 8
      %p63 = por %p61, %p62
      %p65 = scmp.ne.s32.totalorder %s48, %s64
      %p66 = scmp.eq.s32.totalorder %s28, 0
      %p67 = por %p65, %p66
      %s68 = ssub.s32 %s30, %s37
      %p69 = scmp.eq.s32.totalorder %s68, 0
      %s71 = sadd.s32 %s70, 1
      %s72 = scalar_select %p69, %s70, %s71
      %p75 = pneg %p69
      %p76 = scmp.eq.s32.totalorder %s22, 8
      %p77 = por %p75, %p76
      %p78 = scmp.ne.s32.totalorder %s70, %s73
      %p79 = scmp.eq.s32.totalorder %s22, 0
      %p80 = por %p78, %p79
      %p81 = scmp.ne.s32.totalorder %s70, %s73
      %p82 = scmp.eq.s32.totalorder %s27, 8
      %p83 = por %p81, %p82
      %p84 = scmp.ne.s32.totalorder %s73, %s74
      %p85 = scmp.eq.s32.totalorder %s27, 0
      %p86 = por %p84, %p85
      %p87 = scmp.ne.s32.totalorder %s73, %s74
      %p88 = scmp.eq.s32.totalorder %s28, 8
      %p89 = por %p87, %p88
      %p91 = scmp.ne.s32.totalorder %s74, %s90
      %p92 = scmp.eq.s32.totalorder %s28, 0
      %p93 = por %p91, %p92
      %s94 = ssub.s32 %s30, %s37
      %p95 = scmp.eq.s32.totalorder %s94, 0
      %s97 = sadd.s32 %s96, 1
      %s98 = scalar_select %p95, %s96, %s97
      %p101 = pneg %p95
      %p102 = scmp.eq.s32.totalorder %s22, 8
      %p103 = por %p101, %p102
      %p104 = scmp.ne.s32.totalorder %s96, %s99
      %p105 = scmp.eq.s32.totalorder %s22, 0
      %p106 = por %p104, %p105
      %p107 = scmp.ne.s32.totalorder %s96, %s99
      %p108 = scmp.eq.s32.totalorder %s27, 8
      %p109 = por %p107, %p108
      %p110 = scmp.ne.s32.totalorder %s99, %s100
      %p111 = scmp.eq.s32.totalorder %s27, 0
      %p112 = por %p110, %p111
      %p113 = scmp.ne.s32.totalorder %s99, %s100
      %p114 = scmp.eq.s32.totalorder %s28, 8
      %p115 = por %p113, %p114
      %p117 = scmp.ne.s32.totalorder %s100, %s116
      %p118 = scmp.eq.s32.totalorder %s28, 0
      %p119 = por %p117, %p118
      %s120 = ssub.s32 %s30, %s37
      %p121 = scmp.eq.s32.totalorder %s120, 0
      %s123 = sadd.s32 %s122, 1
      %s124 = scalar_select %p121, %s122, %s123
      %p127 = pneg %p121
      %p128 = scmp.eq.s32.totalorder %s22, 8
      %p129 = por %p127, %p128
      %p130 = scmp.ne.s32.totalorder %s122, %s125
      %p131 = scmp.eq.s32.totalorder %s22, 0
      %p132 = por %p130, %p131
      %p133 = scmp.ne.s32.totalorder %s122, %s125
      %p134 = scmp.eq.s32.totalorder %s27, 8
      %p135 = por %p133, %p134
      %p136 = scmp.ne.s32.totalorder %s125, %s126
      %p137 = scmp.eq.s32.totalorder %s27, 0
      %p138 = por %p136, %p137
      %p139 = scmp.ne.s32.totalorder %s125, %s126
      %p140 = scmp.eq.s32.totalorder %s28, 8
      %p141 = por %p139, %p140
      %p143 = scmp.ne.s32.totalorder %s126, %s142
      %p144 = scmp.eq.s32.totalorder %s28, 0
      %p145 = por %p143, %p144
      %s146 = ssub.s32 %s29, %s41
      %p147 = scmp.eq.s32.totalorder %s146, 0
      %s149 = sadd.s32 %s148, 1
      %s150 = scalar_select %p147, %s148, %s149
      %p153 = pneg %p147
      %p154 = scmp.eq.s32.totalorder %s22, 8
      %p155 = por %p153, %p154
      %p156 = scmp.ne.s32.totalorder %s148, %s151
      %p157 = scmp.eq.s32.totalorder %s22, 0
      %p158 = por %p156, %p157
      %p159 = scmp.ne.s32.totalorder %s148, %s151
      %p160 = scmp.eq.s32.totalorder %s27, 8
      %p161 = por %p159, %p160
      %p162 = scmp.ne.s32.totalorder %s151, %s152
      %p163 = scmp.eq.s32.totalorder %s27, 0
      %p164 = por %p162, %p163
      %p165 = scmp.ne.s32.totalorder %s151, %s152
      %p166 = scmp.eq.s32.totalorder %s28, 8
      %p167 = por %p165, %p166
      %p169 = scmp.ne.s32.totalorder %s152, %s168
      %p170 = scmp.eq.s32.totalorder %s28, 0
      %p171 = por %p169, %p170
      %p172 = scmp.le.s32.totalorder 1, %s22
      %p173 = scmp.lt.s32.totalorder %s22, 10
      %p174 = pnand %p172, %p173
      %p175 = pneg %p174
      // Predicated region
      $region9: #{tpu_custom_call.1} parent=5 // pred_check
        _
      $region10: #{tpu_custom_call.1} parent=5 // pred_check_branch
        %177 = sbr.rel (%p174) target = $region12
      $region11: #{tpu_custom_call.1} parent=5 // pred_region
        %s178 = ssub.s32 %s22, 1
      $region12: #{tpu_custom_call.1} parent=5 // pred_fallthru
        _
      %p179 = scmp.lt.s32.totalorder %s22, 9
      // Predicated region
      $region13: #{tpu_custom_call.1} parent=5 // pred_check
        %p180 = pneg %p179
      $region14: #{tpu_custom_call.1} parent=5 // pred_check_branch
        %182 = sbr.rel (%p180) target = $region16
      $region15: #{tpu_custom_call.1} parent=5 // pred_region
        // Predicated region
        $region17: #{tpu_custom_call.1} parent=15 // pred_check
          %p183 = pneg %p54
        $region18: #{tpu_custom_call.1} parent=15 // pred_check_branch
          %185 = sbr.rel (%p183) target = $region20
        $region19: #{tpu_custom_call.1} parent=15 // pred_region
          %s186 = sand.u32 %s44, 1
          %s187 = scalar_lea.sflag [#allocation5], %s186
          %s188 = sand.u32 %s44, 1
          %s189 = smul.addr %s188, 16
          %s190 = scalar_lea.vmem [#allocation4], %s189
          %s191 = smul.u32 2, %s29
          %s193 = ssub.s32 256, 256
          %194 = vsyncadd %s187, %s193
          %s195 = smul.addr %s191, 128
          %s196 = scalar_lea.hbm %s0, %s195
          %s197 = sshll.u32 %s190, 4
          %s198 = int_to_ptr.vmem [resolvable:$true] %s197
          %203 = dma.hbm_to_vmem [thread:$0]  %s196, 256, %s198, %s187, 128, 128, 8
        $region20: #{tpu_custom_call.1} parent=15 // pred_fallthru
          _
        // Predicated region
        $region21: #{tpu_custom_call.1} parent=15 // pred_check
          %p204 = pneg %p80
        $region22: #{tpu_custom_call.1} parent=15 // pred_check_branch
          %206 = sbr.rel (%p204) target = $region24
        $region23: #{tpu_custom_call.1} parent=15 // pred_region
          %s207 = sand.u32 %s22, 1
          %s208 = scalar_lea.sflag [#allocation8], %s207
          %s209 = sand.u32 %s70, 1
          %s210 = smul.addr %s209, 128
          %s211 = scalar_lea.vmem [#allocation7], %s210
          %s213 = ssub.s32 2048, 2048
          %214 = vsyncadd %s208, %s213
          %s215 = smul.addr %s30, 128
          %s216 = scalar_lea.hbm %s1, %s215
          %s217 = sshll.u32 %s211, 4
          %s218 = int_to_ptr.vmem [resolvable:$true] %s217
          %223 = dma.hbm_to_vmem [thread:$0]  %s216, 2048, %s218, %s208, 384, 128, 8
        $region24: #{tpu_custom_call.1} parent=15 // pred_fallthru
          _
        // Predicated region
        $region25: #{tpu_custom_call.1} parent=15 // pred_check
          %p224 = pneg %p106
        $region26: #{tpu_custom_call.1} parent=15 // pred_check_branch
          %226 = sbr.rel (%p224) target = $region28
        $region27: #{tpu_custom_call.1} parent=15 // pred_region
          %s227 = sand.u32 %s22, 1
          %s228 = scalar_lea.sflag [#allocation8], %s227
          %s229 = sand.u32 %s96, 1
          %s230 = smul.addr %s229, 128
          %s231 = scalar_lea.vmem [#allocation9], %s230
          %s233 = ssub.s32 2048, 2048
          %234 = vsyncadd %s228, %s233
          %s235 = smul.addr %s30, 128
          %s236 = scalar_lea.hbm %s2, %s235
          %s237 = sshll.u32 %s231, 4
          %s238 = int_to_ptr.vmem [resolvable:$true] %s237
          %243 = dma.hbm_to_vmem [thread:$0]  %s236, 2048, %s238, %s228, 384, 128, 8
        $region28: #{tpu_custom_call.1} parent=15 // pred_fallthru
          _
        // Predicated region
        $region29: #{tpu_custom_call.1} parent=15 // pred_check
          %p244 = pneg %p132
        $region30: #{tpu_custom_call.1} parent=15 // pred_check_branch
          %246 = sbr.rel (%p244) target = $region32
        $region31: #{tpu_custom_call.1} parent=15 // pred_region
          %s247 = sand.u32 %s122, 1
          %s248 = scalar_lea.sflag [#allocation11], %s247
          %s249 = sand.u32 %s122, 1
          %s250 = smul.addr %s249, 128
          %s251 = scalar_lea.vmem [#allocation10], %s250
          %s252 = smul.u32 16, %s30
          %s254 = ssub.s32 2048, 2048
          %255 = vsyncadd %s248, %s254
          %s256 = smul.addr %s252, 128
          %s257 = scalar_lea.hbm %s3, %s256
          %s258 = sshll.u32 %s251, 4
          %s259 = int_to_ptr.vmem [resolvable:$true] %s258
          %264 = dma.hbm_to_vmem [thread:$0]  %s257, 2048, %s259, %s248, 128, 128, 8
        $region32: #{tpu_custom_call.1} parent=15 // pred_fallthru
          _
      $region16: #{tpu_custom_call.1} parent=5 // pred_fallthru
        _
      %p265 = scmp.le.s32.totalorder 1, %s22
      %p266 = scmp.lt.s32.totalorder %s22, 10
      %p267 = pnand %p265, %p266
      %p268 = pneg %p267
      // Predicated region
      $region33: #{tpu_custom_call.1} parent=5 // pred_check
        _
      $region34: #{tpu_custom_call.1} parent=5 // pred_check_branch
        %270 = sbr.rel (%p267) target = $region36
      $region35: #{tpu_custom_call.1} parent=5 // pred_region
        %s271 = ssub.s32 %s22, 1
        %s272 = sand.u32 %s47, 1
        %s273 = scalar_lea.sflag [#allocation5], %s272
        %s274 = sand.u32 %s47, 1
        %s275 = smul.addr %s274, 16
        %s276 = scalar_lea.vmem [#allocation4], %s275
        // Predicated region
        $region37: #{tpu_custom_call.1} parent=35 // pred_check
          %p277 = pneg %p60
        $region38: #{tpu_custom_call.1} parent=35 // pred_check_branch
          %279 = sbr.rel (%p277) target = $region40
        $region39: #{tpu_custom_call.1} parent=35 // pred_region
          %280 = dma.done %s273, 256
        $region40: #{tpu_custom_call.1} parent=35 // pred_fallthru
          _
        %s281 = sand.u32 %s27, 1
        %s282 = scalar_lea.sflag [#allocation8], %s281
        %s283 = sand.u32 %s73, 1
        %s284 = smul.addr %s283, 128
        %s285 = scalar_lea.vmem [#allocation7], %s284
        // Predicated region
        $region41: #{tpu_custom_call.1} parent=35 // pred_check
          %p286 = pneg %p86
        $region42: #{tpu_custom_call.1} parent=35 // pred_check_branch
          %288 = sbr.rel (%p286) target = $region44
        $region43: #{tpu_custom_call.1} parent=35 // pred_region
          %289 = dma.done %s282, 2048
        $region44: #{tpu_custom_call.1} parent=35 // pred_fallthru
          _
        %s290 = sand.u32 %s27, 1
        %s291 = scalar_lea.sflag [#allocation8], %s290
        %s292 = sand.u32 %s99, 1
        %s293 = smul.addr %s292, 128
        %s294 = scalar_lea.vmem [#allocation9], %s293
        // Predicated region
        $region45: #{tpu_custom_call.1} parent=35 // pred_check
          %p295 = pneg %p112
        $region46: #{tpu_custom_call.1} parent=35 // pred_check_branch
          %297 = sbr.rel (%p295) target = $region48
        $region47: #{tpu_custom_call.1} parent=35 // pred_region
          %298 = dma.done %s291, 2048
        $region48: #{tpu_custom_call.1} parent=35 // pred_fallthru
          _
        %s299 = sand.u32 %s125, 1
        %s300 = scalar_lea.sflag [#allocation11], %s299
        %s301 = sand.u32 %s125, 1
        %s302 = smul.addr %s301, 128
        %s303 = scalar_lea.vmem [#allocation10], %s302
        // Predicated region
        $region49: #{tpu_custom_call.1} parent=35 // pred_check
          %p304 = pneg %p138
        $region50: #{tpu_custom_call.1} parent=35 // pred_check_branch
          %306 = sbr.rel (%p304) target = $region52
        $region51: #{tpu_custom_call.1} parent=35 // pred_region
          %307 = dma.done %s300, 2048
        $region52: #{tpu_custom_call.1} parent=35 // pred_fallthru
          _
        %s308 = sand.u32 %s47, 1
        %s309 = scalar_lea.sflag [#allocation5], %s308
        %s310 = sand.u32 %s47, 1
        %s311 = smul.addr %s310, 16
        %s312 = scalar_lea.vmem [#allocation4], %s311
        %p313 = pneg %p60
        %p314 = pneg %p57
        %s315 = sand.u32 %s27, 1
        %s316 = scalar_lea.sflag [#allocation8], %s315
        %s317 = sand.u32 %s73, 1
        %s318 = smul.addr %s317, 128
        %s319 = scalar_lea.vmem [#allocation7], %s318
        %p320 = pneg %p86
        %p321 = pneg %p83
        %s322 = sand.u32 %s27, 1
        %s323 = scalar_lea.sflag [#allocation8], %s322
        %s324 = sand.u32 %s99, 1
        %s325 = smul.addr %s324, 128
        %s326 = scalar_lea.vmem [#allocation9], %s325
        %p327 = pneg %p112
        %p328 = pneg %p109
        %s329 = sand.u32 %s125, 1
        %s330 = scalar_lea.sflag [#allocation11], %s329
        %s331 = sand.u32 %s125, 1
        %s332 = smul.addr %s331, 128
        %s333 = scalar_lea.vmem [#allocation10], %s332
        %p334 = pneg %p138
        %p335 = pneg %p135
        %p336 = pneg %p164
        %p337 = pneg %p161
        %s338 = sand.u32 %s151, 1
        %s339 = scalar_lea.sflag [#allocation6], %s338
        %s340 = sand.u32 %s151, 1
        %s341 = smul.addr %s340, 16
        %s342 = scalar_lea.vmem [#allocation12], %s341
        %s343 = smul.u32 2, %s31
        %s344 = smul.u32 16, %s32
        %s345 = smul.u32 2, %s31
        %p346 = scmp.eq.s32.totalorder %s32, 0
        // Predicated region
        $region53: #{tpu_custom_call.1} parent=35 // pred_check
          %p347 = pneg %p346
        $region54: #{tpu_custom_call.1} parent=35 // pred_check_branch
          %349 = sbr.rel (%p347) target = $region56
        $region55: #{tpu_custom_call.1} parent=35 // pred_region
          %v350 = vld [vmem:[%s276] sm:$0xff]
          %v351 = vld [vmem:[%s276 + $0x8] sm:$0xff]
          %v352 = vmul.f32 %v350, %v350
          %v353 = vmul.f32 %v351, %v351
          %354 = vadd.xlane.f32.xlu0 %v352
          %v355 = vpop.xlane.xlu0 %354
          %356 = vadd.xlane.f32.xlu0 %v353
          %v357 = vpop.xlane.xlu0 %356
          %v358 = vmul.f32 %v355, 0.010416667
          %v359 = vmul.f32 %v357, 0.010416667
          %v360 = vadd.f32 %v358, 1e-06
          %v361 = vadd.f32 %v359, 1e-06
          %v362 = vrsqrt.pop %v360
          %v363 = vrsqrt.pop %v361
          %v364 = vmul.f32 %v350, %v362
          %v365 = vmul.f32 %v351, %v363
          %366 = vst [vmem:[#allocation2] sm:$0xff] %v364
          %367 = vst [vmem:[#allocation2 + $0x8] sm:$0xff] %v365
          %368 = vst [vmem:[#allocation3] sm:$0xff] 0.0
          %369 = vst [vmem:[#allocation3 + $0x8] sm:$0xff] 0.0
        $region56: #{tpu_custom_call.1} parent=35 // pred_fallthru
          _
        %v370 = vld [vmem:[#allocation2] sm:$0xff]
        %v371 = vld [vmem:[#allocation2 + $0x8] sm:$0xff]
        %v372 = vld [vmem:[%s285] sm:$0xff]
        %v373 = vld [vmem:[%s285 + $0x8] sm:$0xff]
        %v374 = vld [vmem:[%s285 + $0x10] sm:$0xff]
        %v375 = vld [vmem:[%s285 + $0x18] sm:$0xff]
        %v376 = vld [vmem:[%s285 + $0x20] sm:$0xff]
        %v377 = vld [vmem:[%s285 + $0x28] sm:$0xff]
        %v378 = vld [vmem:[%s285 + $0x30] sm:$0xff]
        %v379 = vld [vmem:[%s285 + $0x38] sm:$0xff]
        %v380 = vld [vmem:[%s285 + $0x40] sm:$0xff]
        %v381 = vld [vmem:[%s285 + $0x48] sm:$0xff]
        %v382 = vld [vmem:[%s285 + $0x50] sm:$0xff]
        %v383 = vld [vmem:[%s285 + $0x58] sm:$0xff]
        %v384 = vld [vmem:[%s285 + $0x60] sm:$0xff]
        %v385 = vld [vmem:[%s285 + $0x68] sm:$0xff]
        %v386 = vld [vmem:[%s285 + $0x70] sm:$0xff]
        %v387 = vld [vmem:[%s285 + $0x78] sm:$0xff]
        %388 = vmatprep.subr.mxu0 0.0
        %389 = vmatpush1.msra.mxu0 %v372
        %390 = vmatprep.subr.mxu0 0.0
        %391 = vmatpush1.msra.mxu0 %v373
        %392 = vmatprep.subr.mxu0 0.0
        %393 = vmatpush1.msra.mxu0 %v374
        %394 = vmatprep.subr.mxu0 0.0
        %395 = vmatpush1.msra.mxu0 %v375
        %396 = vmatprep.subr.mxu0 0.0
        %397 = vmatpush1.msra.mxu0 %v376
        %398 = vmatprep.subr.mxu0 0.0
        %399 = vmatpush1.msra.mxu0 %v377
        %400 = vmatprep.subr.mxu0 0.0
        %401 = vmatpush1.msra.mxu0 %v378
        %402 = vmatprep.subr.mxu0 0.0
        %403 = vmatpush1.msra.mxu0 %v379
        %404 = vmatprep.subr.mxu0 0.0
        %405 = vmatpush1.msra.mxu0 %v380
        %406 = vmatprep.subr.mxu0 0.0
        %407 = vmatpush1.msra.mxu0 %v381
        %408 = vmatprep.subr.mxu0 0.0
        %409 = vmatpush1.msra.mxu0 %v382
        %410 = vmatprep.subr.mxu0 0.0
        %411 = vmatpush1.msra.mxu0 %v383
        %412 = vmatprep.subr.mxu0 0.0
        %413 = vmatpush1.msra.mxu0 %v384
        %414 = vmatprep.subr.mxu0 0.0
        %415 = vmatpush1.msra.mxu0 %v385
        %416 = vmatprep.subr.mxu0 0.0
        %417 = vmatpush1.msra.mxu0 %v386
        %418 = vmatprep.subr.mxu0 0.0
        %419 = vmatpush1.msra.mxu0 %v387
        %420 = vmatprep.subr.mxu0 0.0
        %421 = vmatpush1.msra.mxu0 0.0
        %422 = vmatprep.subr.mxu0 0.0
        %423 = vmatpush1.msra.mxu0 0.0
        %424 = vmatprep.subr.mxu0 0.0
        %425 = vmatpush1.msra.mxu0 0.0
        %426 = vmatprep.subr.mxu0 0.0
        %427 = vmatpush1.msra.mxu0 0.0
        %428 = vmatprep.subr.mxu0 0.0
        %429 = vmatpush1.msra.mxu0 0.0
        %430 = vmatprep.subr.mxu0 0.0
        %431 = vmatpush1.msra.mxu0 0.0
        %432 = vmatprep.subr.mxu0 0.0
        %433 = vmatpush1.msra.mxu0 0.0
        %434 = vmatprep.subr.mxu0 0.0
        %435 = vmatpush1.msra.mxu0 0.0
        %436 = vmatprep.subr.mxu0 0.0
        %437 = vmatpush1.msra.mxu0 0.0
        %438 = vmatprep.subr.mxu0 0.0
        %439 = vmatpush1.msra.mxu0 0.0
        %440 = vmatprep.subr.mxu0 0.0
        %441 = vmatpush1.msra.mxu0 0.0
        %442 = vmatprep.subr.mxu0 0.0
        %443 = vmatpush1.msra.mxu0 0.0
        %444 = vmatprep.subr.mxu0 0.0
        %445 = vmatpush1.msra.mxu0 0.0
        %446 = vmatprep.subr.mxu0 0.0
        %447 = vmatpush1.msra.mxu0 0.0
        %448 = vmatprep.subr.mxu0 0.0
        %449 = vmatpush1.msra.mxu0 0.0
        %450 = vmatprep.subr.mxu0 0.0
        %451 = vmatpush1.msra.mxu0 0.0
        %452 = vmatprep.mubr.f32.mxu0 0.0
        %453 = vmatmul.mubr.f32.gmra.mrb[0].mxu0 %v370
        %v454 = vpop.f32.mrb[0].mxu0
        %v455 = vadd.f32 0.0, %v454
        %v456 = vpop.f32.mrb[0].mxu0
        %457 = vmatprep.mubr.f32.mxu0 0.0
        %458 = vmatmul.mubr.f32.gmra.mrb[0].mxu0 %v371
        %v459 = vpop.f32.mrb[0].mxu0
        %v460 = vadd.f32 0.0, %v459
        %v461 = vpop.f32.mrb[0].mxu0
        %462 = vdwg.mxu0
        %v463 = vld [vmem:[%s294] sm:$0xff]
        %v464 = vld [vmem:[%s294 + $0x8] sm:$0xff]
        %v465 = vld [vmem:[%s294 + $0x10] sm:$0xff]
        %v466 = vld [vmem:[%s294 + $0x18] sm:$0xff]
        %v467 = vld [vmem:[%s294 + $0x20] sm:$0xff]
        %v468 = vld [vmem:[%s294 + $0x28] sm:$0xff]
        %v469 = vld [vmem:[%s294 + $0x30] sm:$0xff]
        %v470 = vld [vmem:[%s294 + $0x38] sm:$0xff]
        %v471 = vld [vmem:[%s294 + $0x40] sm:$0xff]
        %v472 = vld [vmem:[%s294 + $0x48] sm:$0xff]
        %v473 = vld [vmem:[%s294 + $0x50] sm:$0xff]
        %v474 = vld [vmem:[%s294 + $0x58] sm:$0xff]
        %v475 = vld [vmem:[%s294 + $0x60] sm:$0xff]
        %v476 = vld [vmem:[%s294 + $0x68] sm:$0xff]
        %v477 = vld [vmem:[%s294 + $0x70] sm:$0xff]
        %v478 = vld [vmem:[%s294 + $0x78] sm:$0xff]
        %479 = vmatprep.subr.mxu0 0.0
        %480 = vmatpush1.msra.mxu0 %v463
        %481 = vmatprep.subr.mxu0 0.0
        %482 = vmatpush1.msra.mxu0 %v464
        %483 = vmatprep.subr.mxu0 0.0
        %484 = vmatpush1.msra.mxu0 %v465
        %485 = vmatprep.subr.mxu0 0.0
        %486 = vmatpush1.msra.mxu0 %v466
        %487 = vmatprep.subr.mxu0 0.0
        %488 = vmatpush1.msra.mxu0 %v467
        %489 = vmatprep.subr.mxu0 0.0
        %490 = vmatpush1.msra.mxu0 %v468
        %491 = vmatprep.subr.mxu0 0.0
        %492 = vmatpush1.msra.mxu0 %v469
        %493 = vmatprep.subr.mxu0 0.0
        %494 = vmatpush1.msra.mxu0 %v470
        %495 = vmatprep.subr.mxu0 0.0
        %496 = vmatpush1.msra.mxu0 %v471
        %497 = vmatprep.subr.mxu0 0.0
        %498 = vmatpush1.msra.mxu0 %v472
        %499 = vmatprep.subr.mxu0 0.0
        %500 = vmatpush1.msra.mxu0 %v473
        %501 = vmatprep.subr.mxu0 0.0
        %502 = vmatpush1.msra.mxu0 %v474
        %503 = vmatprep.subr.mxu0 0.0
        %504 = vmatpush1.msra.mxu0 %v475
        %505 = vmatprep.subr.mxu0 0.0
        %506 = vmatpush1.msra.mxu0 %v476
        %507 = vmatprep.subr.mxu0 0.0
        %508 = vmatpush1.msra.mxu0 %v477
        %509 = vmatprep.subr.mxu0 0.0
        %510 = vmatpush1.msra.mxu0 %v478
        %511 = vmatprep.subr.mxu0 0.0
        %512 = vmatpush1.msra.mxu0 0.0
        %513 = vmatprep.subr.mxu0 0.0
        %514 = vmatpush1.msra.mxu0 0.0
        %515 = vmatprep.subr.mxu0 0.0
        %516 = vmatpush1.msra.mxu0 0.0
        %517 = vmatprep.subr.mxu0 0.0
        %518 = vmatpush1.msra.mxu0 0.0
        %519 = vmatprep.subr.mxu0 0.0
        %520 = vmatpush1.msra.mxu0 0.0
        %521 = vmatprep.subr.mxu0 0.0
        %522 = vmatpush1.msra.mxu0 0.0
        %523 = vmatprep.subr.mxu0 0.0
        %524 = vmatpush1.msra.mxu0 0.0
        %525 = vmatprep.subr.mxu0 0.0
        %526 = vmatpush1.msra.mxu0 0.0
        %527 = vmatprep.subr.mxu0 0.0
        %528 = vmatpush1.msra.mxu0 0.0
        %529 = vmatprep.subr.mxu0 0.0
        %530 = vmatpush1.msra.mxu0 0.0
        %531 = vmatprep.subr.mxu0 0.0
        %532 = vmatpush1.msra.mxu0 0.0
        %533 = vmatprep.subr.mxu0 0.0
        %534 = vmatpush1.msra.mxu0 0.0
        %535 = vmatprep.subr.mxu0 0.0
        %536 = vmatpush1.msra.mxu0 0.0
        %537 = vmatprep.subr.mxu0 0.0
        %538 = vmatpush1.msra.mxu0 0.0
        %539 = vmatprep.subr.mxu0 0.0
        %540 = vmatpush1.msra.mxu0 0.0
        %541 = vmatprep.subr.mxu0 0.0
        %542 = vmatpush1.msra.mxu0 0.0
        %543 = vmatprep.mubr.f32.mxu0 0.0
        %544 = vmatmul.mubr.f32.gmra.mrb[0].mxu0 %v370
        %v545 = vpop.f32.mrb[0].mxu0
        %v546 = vadd.f32 0.0, %v545
        %v547 = vpop.f32.mrb[0].mxu0
        %548 = vmatprep.mubr.f32.mxu0 0.0
        %549 = vmatmul.mubr.f32.gmra.mrb[0].mxu0 %v371
        %v550 = vpop.f32.mrb[0].mxu0
        %v551 = vadd.f32 0.0, %v550
        %v552 = vpop.f32.mrb[0].mxu0
        %553 = vdwg.mxu0
        %v554 = vmul.f32 %v455, 0.5
        %v555 = vmul.f32 %v460, 0.5
        %v556 = vmul.f32 %v455, 0.044715
        %v557 = vmul.f32 %v460, 0.044715
        %v558 = vmul.f32 %v556, %v455
        %v559 = vmul.f32 %v557, %v460
        %v560 = vmul.f32 %v558, %v455
        %v561 = vmul.f32 %v559, %v460
        %v562 = vadd.f32 %v455, %v560
        %v563 = vadd.f32 %v460, %v561
        %v564 = vmul.f32 %v562, 0.7978846
        %v565 = vmul.f32 %v563, 0.7978846
        %v566 = vtanh.pop %v564
        %v567 = vtanh.pop %v565
        %v568 = vadd.f32 %v566, 1.0
        %v569 = vadd.f32 %v567, 1.0
        %v570 = vmul.f32 %v554, %v568
        %v571 = vmul.f32 %v555, %v569
        %v572 = vmul.f32 %v570, %v546
        %v573 = vmul.f32 %v571, %v551
        %v574 = vld [vmem:[#allocation3] sm:$0xff]
        %v575 = vld [vmem:[#allocation3 + $0x8] sm:$0xff]
        %v576 = vld [vmem:[%s303] sm:$0xff]
        %v577 = vld [vmem:[%s303 + $0x8] sm:$0xff]
        %v578 = vld [vmem:[%s303 + $0x10] sm:$0xff]
        %v579 = vld [vmem:[%s303 + $0x18] sm:$0xff]
        %v580 = vld [vmem:[%s303 + $0x20] sm:$0xff]
        %v581 = vld [vmem:[%s303 + $0x28] sm:$0xff]
        %v582 = vld [vmem:[%s303 + $0x30] sm:$0xff]
        %v583 = vld [vmem:[%s303 + $0x38] sm:$0xff]
        %v584 = vld [vmem:[%s303 + $0x40] sm:$0xff]
        %v585 = vld [vmem:[%s303 + $0x48] sm:$0xff]
        %v586 = vld [vmem:[%s303 + $0x50] sm:$0xff]
        %v587 = vld [vmem:[%s303 + $0x58] sm:$0xff]
        %v588 = vld [vmem:[%s303 + $0x60] sm:$0xff]
        %v589 = vld [vmem:[%s303 + $0x68] sm:$0xff]
        %v590 = vld [vmem:[%s303 + $0x70] sm:$0xff]
        %v591 = vld [vmem:[%s303 + $0x78] sm:$0xff]
        %592 = vmatprep.subr.mxu0 0.0
        %593 = vmatpush1.msra.mxu0 %v576
        %594 = vmatprep.subr.mxu0 0.0
        %595 = vmatpush1.msra.mxu0 %v577
        %596 = vmatprep.subr.mxu0 0.0
        %597 = vmatpush1.msra.mxu0 %v578
        %598 = vmatprep.subr.mxu0 0.0
        %599 = vmatpush1.msra.mxu0 %v579
        %600 = vmatprep.subr.mxu0 0.0
        %601 = vmatpush1.msra.mxu0 %v580
        %602 = vmatprep.subr.mxu0 0.0
        %603 = vmatpush1.msra.mxu0 %v581
        %604 = vmatprep.subr.mxu0 0.0
        %605 = vmatpush1.msra.mxu0 %v582
        %606 = vmatprep.subr.mxu0 0.0
        %607 = vmatpush1.msra.mxu0 %v583
        %608 = vmatprep.subr.mxu0 0.0
        %609 = vmatpush1.msra.mxu0 %v584
        %610 = vmatprep.subr.mxu0 0.0
        %611 = vmatpush1.msra.mxu0 %v585
        %612 = vmatprep.subr.mxu0 0.0
        %613 = vmatpush1.msra.mxu0 %v586
        %614 = vmatprep.subr.mxu0 0.0
        %615 = vmatpush1.msra.mxu0 %v587
        %616 = vmatprep.subr.mxu0 0.0
        %617 = vmatpush1.msra.mxu0 %v588
        %618 = vmatprep.subr.mxu0 0.0
        %619 = vmatpush1.msra.mxu0 %v589
        %620 = vmatprep.subr.mxu0 0.0
        %621 = vmatpush1.msra.mxu0 %v590
        %622 = vmatprep.subr.mxu0 0.0
        %623 = vmatpush1.msra.mxu0 %v591
        %624 = vmatprep.subr.mxu0 0.0
        %625 = vmatpush1.msra.mxu0 0.0
        %626 = vmatprep.subr.mxu0 0.0
        %627 = vmatpush1.msra.mxu0 0.0
        %628 = vmatprep.subr.mxu0 0.0
        %629 = vmatpush1.msra.mxu0 0.0
        %630 = vmatprep.subr.mxu0 0.0
        %631 = vmatpush1.msra.mxu0 0.0
        %632 = vmatprep.subr.mxu0 0.0
        %633 = vmatpush1.msra.mxu0 0.0
        %634 = vmatprep.subr.mxu0 0.0
        %635 = vmatpush1.msra.mxu0 0.0
        %636 = vmatprep.subr.mxu0 0.0
        %637 = vmatpush1.msra.mxu0 0.0
        %638 = vmatprep.subr.mxu0 0.0
        %639 = vmatpush1.msra.mxu0 0.0
        %640 = vmatprep.subr.mxu0 0.0
        %641 = vmatpush1.msra.mxu0 0.0
        %642 = vmatprep.subr.mxu0 0.0
        %643 = vmatpush1.msra.mxu0 0.0
        %644 = vmatprep.subr.mxu0 0.0
        %645 = vmatpush1.msra.mxu0 0.0
        %646 = vmatprep.subr.mxu0 0.0
        %647 = vmatpush1.msra.mxu0 0.0
        %648 = vmatprep.subr.mxu0 0.0
        %649 = vmatpush1.msra.mxu0 0.0
        %650 = vmatprep.subr.mxu0 0.0
        %651 = vmatpush1.msra.mxu0 0.0
        %652 = vmatprep.subr.mxu0 0.0
        %653 = vmatpush1.msra.mxu0 0.0
        %654 = vmatprep.subr.mxu0 0.0
        %655 = vmatpush1.msra.mxu0 0.0
        %656 = vmatprep.mubr.f32.mxu0 0.0
        %657 = vmatmul.mubr.f32.gmra.mrb[0].mxu0 %v572
        %v658 = vpop.f32.mrb[0].mxu0
        %v659 = vadd.f32 0.0, %v658
        %v660 = vpop.f32.mrb[0].mxu0
        %661 = vmatprep.mubr.f32.mxu0 0.0
        %662 = vmatmul.mubr.f32.gmra.mrb[0].mxu0 %v573
        %v663 = vpop.f32.mrb[0].mxu0
        %v664 = vadd.f32 0.0, %v663
        %v665 = vpop.f32.mrb[0].mxu0
        %666 = vdwg.mxu0
        %v667 = vadd.f32 %v574, %v659
        %v668 = vadd.f32 %v575, %v664
        %669 = vst [vmem:[#allocation3] sm:$0xff] %v667
        %670 = vst [vmem:[#allocation3 + $0x8] sm:$0xff] %v668
        %p671 = scmp.eq.s32.totalorder %s32, 2
        // Predicated region
        $region57: #{tpu_custom_call.1} parent=35 // pred_check
          %p672 = pneg %p671
        $region58: #{tpu_custom_call.1} parent=35 // pred_check_branch
          %674 = sbr.rel (%p672) target = $region60
        $region59: #{tpu_custom_call.1} parent=35 // pred_region
          %v675 = vld [vmem:[%s276] sm:$0xff]
          %v676 = vld [vmem:[%s276 + $0x8] sm:$0xff]
          %v677 = vld [vmem:[#allocation3] sm:$0xff]
          %v678 = vld [vmem:[#allocation3 + $0x8] sm:$0xff]
          %v679 = vadd.f32 %v675, %v677
          %v680 = vadd.f32 %v676, %v678
          %681 = vst [vmem:[%s342] sm:$0xff] %v679
          %682 = vst [vmem:[%s342 + $0x8] sm:$0xff] %v680
        $region60: #{tpu_custom_call.1} parent=35 // pred_fallthru
          _
        %s683 = sand.u32 %s151, 1
        %s684 = scalar_lea.sflag [#allocation6], %s683
        %s685 = sand.u32 %s151, 1
        %s686 = smul.addr %s685, 16
        %s687 = scalar_lea.vmem [#allocation12], %s686
        // Predicated region
        $region61: #{tpu_custom_call.1} parent=35 // pred_check
          %p688 = pneg %p161
        $region62: #{tpu_custom_call.1} parent=35 // pred_check_branch
          %690 = sbr.rel (%p688) target = $region64
        $region63: #{tpu_custom_call.1} parent=35 // pred_region
          %s691 = smul.u32 2, %s31
          %s693 = ssub.s32 256, 256
          %694 = vsyncadd %s684, %s693
          %s695 = smul.addr %s691, 128
          %s696 = scalar_lea.hbm %s4, %s695
          %s697 = sshll.u32 %s687, 4
          %s698 = int_to_ptr.vmem [resolvable:$true] %s697
          %703 = dma.vmem_to_hbm [thread:$0]  %s698, 256, %s696, %s684, 128, 128, 8
        $region64: #{tpu_custom_call.1} parent=35 // pred_fallthru
          _
      $region36: #{tpu_custom_call.1} parent=5 // pred_fallthru
        _
      %p704 = scmp.le.s32.totalorder 2, %s22
      // Predicated region
      $region65: #{tpu_custom_call.1} parent=5 // pred_check
        %p705 = pneg %p704
      $region66: #{tpu_custom_call.1} parent=5 // pred_check_branch
        %707 = sbr.rel (%p705) target = $region68
      $region67: #{tpu_custom_call.1} parent=5 // pred_region
        %s708 = ssub.s32 %s22, 2
        // Predicated region
        $region69: #{tpu_custom_call.1} parent=67 // pred_check
          %p709 = pneg %p167
        $region70: #{tpu_custom_call.1} parent=67 // pred_check_branch
          %711 = sbr.rel (%p709) target = $region72
        $region71: #{tpu_custom_call.1} parent=67 // pred_region
          %s712 = sand.u32 %s152, 1
          %s713 = scalar_lea.sflag [#allocation6], %s712
          %s714 = sand.u32 %s152, 1
          %s715 = smul.addr %s714, 16
          %s716 = scalar_lea.vmem [#allocation12], %s715
          %717 = dma.done %s713, 256
        $region72: #{tpu_custom_call.1} parent=67 // pred_fallthru
          _
      $region68: #{tpu_custom_call.1} parent=5 // pred_fallthru
        _
    $region6: #{tpu_custom_call.1} parent=1 // loop_footer
      %s26 = sadd.s32 1, %s22
    $region7: #{tpu_custom_call.1} parent=1 // loop_footer_branch
      %21 = sbr.rel target = $region3
    $region8: #{tpu_custom_call.1} parent=1 // loop_exit
      _
    %718 = vsyncpa [#allocation5], 1
    %s719 = scalar_lea.sflag [#allocation5], 1
    %720 = vsyncpa %s719, 1
    %721 = vsyncpa [#allocation8], 1
    %s722 = scalar_lea.sflag [#allocation8], 1
    %723 = vsyncpa %s722, 1
    %724 = vsyncpa [#allocation11], 1
    %s725 = scalar_lea.sflag [#allocation11], 1
    %726 = vsyncpa %s725, 1
    %727 = vsyncpa [#allocation6], 1
    %s728 = scalar_lea.sflag [#allocation6], 1
    %729 = vsyncpa %s728, 1

</llo_original>
